<compile_context>
chip_gen: v5e
topology: v5e:2x2
jax: 0.10.0
libtpu: 0.0.40
codegen_flags: <defaults>
</compile_context>

<pallas_src>
import functools

import jax
import jax.numpy as jnp
import numpy as np
from jax import lax
from jax.experimental import pallas as pl
from jax.experimental.pallas import tpu as pltpu

_GOLDEN = 0x9E3779B9          # seed mixing constant
_HASH_M1 = 0x7FEB352D         # lowbias32 multipliers
_HASH_M2 = 0x846CA68B


def _bert_embedding_kernel(seed_ref, *refs, use_content, use_add, seq_len,
                           dropout_p, train):
    # refs (content=True):  x_ref (TR, F), w_ref (F, H), add_ref (S, H), o_ref (TR, H)
    # refs (content=False): x_ref (TR, H),               add_ref (S, H), o_ref (TR, H)
    if use_content:
        x_ref, w_ref, add_ref, o_ref = refs
        h = jnp.dot(x_ref[...], w_ref[...], preferred_element_type=jnp.float32)
    else:
        x_ref, add_ref, o_ref = refs
        h = x_ref[...].astype(jnp.float32)

    tr, hh = h.shape

    if use_add:
        add = add_ref[...]                       # (S, H) resident: pe (+ bias)
        reps = tr // seq_len
        if reps > 1:
            add = jnp.tile(add, (reps, 1))       # broadcast across sequences in tile
        h = h + add

    if train and dropout_p > 0.0:
        # Inverted dropout with a deterministic counter hash:
        #   gid  = global flat element index (grid-invariant)
        #   keep iff low 24 hash bits >= round(p * 2^24)   (bias <= 2^-24, negligible)
        r_loc = lax.broadcasted_iota(jnp.int32, (tr, hh), 0)
        c_loc = lax.broadcasted_iota(jnp.int32, (tr, hh), 1)
        g_row = pl.program_id(0) * tr + r_loc
        gid = (g_row * hh + c_loc).astype(jnp.uint32)
        z = gid + seed_ref[0].astype(jnp.uint32) * jnp.uint32(_GOLDEN)
        z = z ^ (z >> 16)
        z = z * jnp.uint32(_HASH_M1)
        z = z ^ (z >> 15)
        z = z * jnp.uint32(_HASH_M2)
        z = z ^ (z >> 16)
        r24 = (z & jnp.uint32(0x00FFFFFF)).astype(jnp.int32)
        thr = jnp.int32(min(int(round(dropout_p * float(1 << 24))), 1 << 24))
        keep = r24 >= thr
        h = jnp.where(keep, h * (1.0 / (1.0 - dropout_p)), 0.0)
    # eval mode: nn.Dropout is the identity.

    o_ref[...] = h.astype(o_ref.dtype)


def _dropout_mask_np(seed, n_rows, n_cols, p):
    """Numpy replica of the in-kernel hash mask (for exact testing)."""
    rows = np.arange(n_rows, dtype=np.uint64)[:, None]
    cols = np.arange(n_cols, dtype=np.uint64)[None, :]
    m32 = np.uint64(0xFFFFFFFF)
    smix = np.uint64((int(seed) * _GOLDEN) & 0xFFFFFFFF)
    z = (rows * np.uint64(n_cols) + cols + smix) & m32
    z = z ^ (z >> np.uint64(16))
    z = (z * np.uint64(_HASH_M1)) & m32
    z = z ^ (z >> np.uint64(15))
    z = (z * np.uint64(_HASH_M2)) & m32
    z = z ^ (z >> np.uint64(16))
    r24 = z & np.uint64(0x00FFFFFF)
    thr = np.uint64(min(int(round(p * float(1 << 24))), 1 << 24))
    return r24 >= thr


def sinusoidal_position_table(seq_len, d_h, dtype=jnp.float32):
    """pe[pos, 2i] = sin(pos / 10000^(2i/d)), pe[pos, 2i+1] = cos(...)."""
    pos = np.arange(seq_len, dtype=np.float64)[:, None]
    i = np.arange(0, d_h, 2, dtype=np.float64)
    div = np.exp(-np.log(10000.0) * i / d_h)
    pe = np.zeros((seq_len, d_h), dtype=np.float64)
    pe[:, 0::2] = np.sin(pos * div)
    pe[:, 1::2] = np.cos(pos * div)
    return jnp.asarray(pe, dtype=dtype)


def _pick_seqs_per_tile(B, S, x_cols, H, in_bytes, out_bytes, row_tile,
                        vmem_budget_bytes):
    """k sequences per tile: TR = k*S divides B*S, obeys the (8, .) rule,
    double-buffered x+out blocks fit the VMEM budget, and >= 2 grid tiles are
    preferred (so both v7x TensorCores get work)."""
    per_row = 2 * (x_cols * in_bytes + H * out_bytes)        # double-buffered in+out
    k_vmem = max(1, int(vmem_budget_bytes // max(S * per_row, 1)))
    k_rows = max(1, int(row_tile) // max(S, 1))
    k_hi = max(1, min(B, k_rows, k_vmem))
    best = None
    for k in range(k_hi, 0, -1):
        if B % k:
            continue
        tr = k * S
        if tr % 8 != 0 and tr != B * S:
            continue
        if best is None:
            best = k
        if k < B:                      # >= 2 tiles available -> take it
            best = k
            break
    return best if best is not None else B


def bert_embedding(x, w, b, pe, *, position=True, content=True,
                   dropout_p=0.1, train=False, seed=0, row_tile=1024,
                   vmem_budget_bytes=16 * 1024 * 1024):
    """Returns (embedded, content_weight) like BERTEmbedding.forward / get_weight.

    x : (B, S, F)   w : (F, H)   b : (H,)   pe : (S, H)   ->   out : (B, S, H)

    NOTE: dropout masks are a pure function of (seed, element index); the caller
    must vary `seed` across layers / training steps.
    """
    B, S, F = x.shape
    if content:
        Fw, H = w.shape
        assert Fw == F, "content weight must map feature_size -> d_H"
    else:
        H = F                          # content=False requires x already in d_H
    if position:
        assert pe.shape == (S, H)

    R = B * S
    out_dtype = x.dtype
    x2 = x.reshape(R, F)               # free reshape (contiguous), no pad

    # Resident (S, H) additive table: positional encodings (+ bias folded in).
    if position:
        add = pe.astype(jnp.float32)
        if content:
            add = add + b.astype(jnp.float32)[None, :]
        use_add = True
    elif content:
        add = jnp.broadcast_to(b.astype(jnp.float32)[None, :], (S, H))
        use_add = True
    else:
        add = jnp.zeros((S, H), jnp.float32)
        use_add = False

    in_bytes = jnp.dtype(x.dtype).itemsize
    out_bytes = jnp.dtype(out_dtype).itemsize
    k = _pick_seqs_per_tile(B, S, F, H, in_bytes, out_bytes, row_tile,
                            vmem_budget_bytes)
    TR = k * S
    n_tiles = R // TR

    kernel = functools.partial(
        _bert_embedding_kernel,
        use_content=bool(content),
        use_add=bool(use_add),
        seq_len=int(S),
        dropout_p=float(dropout_p),
        train=bool(train),
    )
    seed_arr = jnp.asarray([seed], dtype=jnp.int32)

    in_specs = [pl.BlockSpec((TR, F), lambda i, s: (i, 0))]
    args = [x2]
    if content:
        in_specs.append(pl.BlockSpec((F, H), lambda i, s: (0, 0)))   # resident weights
        args.append(w)
    in_specs.append(pl.BlockSpec((S, H), lambda i, s: (0, 0)))       # resident pe (+b)
    args.append(add)

    out = pl.pallas_call(
        kernel,
        out_shape=jax.ShapeDtypeStruct((R, H), out_dtype),
        grid_spec=pltpu.PrefetchScalarGridSpec(
            num_scalar_prefetch=1,
            grid=(n_tiles,),
            in_specs=in_specs,
            out_specs=pl.BlockSpec((TR, H), lambda i, s: (i, 0)),
        ),
        compiler_params=pltpu.CompilerParams(
            dimension_semantics=("parallel",),       # no reduction across rows
            vmem_limit_bytes=48 * 1024 * 1024,
        ),
    )(seed_arr, *args)

    out = out.reshape(B, S, H)                       # free reshape, no slice
    # TODO(synk): ContentEmbedding's exact definition is not in the provided source;
    # it is modeled here as a Linear(feature_size -> d_H) whose weight is returned
    # as `content_weight` (module only sets content_weight when content=True).
    return out, (w if content else None)


if __name__ == "__main__":
    # Small shapes consistent with the module: feature_size=16, d_H=32, seq=8, batch=2.
    B, S, F, H = 2, 8, 16, 32

    key = jax.random.PRNGKey(0)
    kx, kw, kb = jax.random.split(key, 3)

    x = jax.random.normal(kx, (B, S, F), dtype=jnp.float32)
    bound = 1.0 / np.sqrt(F)
    w = jax.random.uniform(kw, (F, H), jnp.float32, -bound, bound)
    b = jax.random.uniform(kb, (H,), jnp.float32, -bound, bound)
    pe = sinusoidal_position_table(S, H)

    # 1) Eval mode, content + position (dropout = identity).
    out, content_weight = bert_embedding(x, w, b, pe, position=True, content=True,
                                         dropout_p=0.1, train=False)
    out = jax.block_until_ready(out)
    ref = jnp.einsum("bsf,fh->bsh", x, w) + b[None, None, :] + pe[None, :, :]
    np.testing.assert_allclose(np.asarray(out), np.asarray(ref), rtol=1e-5, atol=1e-5)
    assert content_weight.shape == (F, H)

    # 2) Multi-sequence-per-tile path (k > 1 -> in-kernel tile of the pe table).
    B2 = 4
    x_b4 = jax.random.normal(jax.random.PRNGKey(1), (B2, S, F), dtype=jnp.float32)
    out2, _ = bert_embedding(x_b4, w, b, pe, position=True, content=True,
                             dropout_p=0.1, train=False, row_tile=16)
    out2 = jax.block_until_ready(out2)
    ref2 = jnp.einsum("bsf,fh->bsh", x_b4, w) + b[None, None, :] + pe[None, :, :]
    np.testing.assert_allclose(np.asarray(out2), np.asarray(ref2), rtol=1e-5, atol=1e-5)

    # 3) position=False (content projection + bias only).
    out3, _ = bert_embedding(x, w, b, pe, position=False, content=True, train=False)
    out3 = jax.block_until_ready(out3)
    ref3 = jnp.einsum("bsf,fh->bsh", x, w) + b[None, None, :]
    np.testing.assert_allclose(np.asarray(out3), np.asarray(ref3), rtol=1e-5, atol=1e-5)

    # 4) content=False (x already in d_H) + position.
    x_h = jax.random.normal(jax.random.PRNGKey(2), (B, S, H), dtype=jnp.float32)
    out4, w4 = bert_embedding(x_h, w, b, pe, position=True, content=False, train=False)
    out4 = jax.block_until_ready(out4)
    np.testing.assert_allclose(np.asarray(out4), np.asarray(x_h + pe[None, :, :]),
                               rtol=1e-5, atol=1e-5)
    assert w4 is None

    # 5) Training dropout: exact check against the replicated hash mask.
    p, dseed = 0.5, 123
    out_tr, _ = bert_embedding(x, w, b, pe, position=True, content=True,
                               dropout_p=p, train=True, seed=dseed)
    out_tr = np.asarray(jax.block_until_ready(out_tr))
    keep = _dropout_mask_np(dseed, B * S, H, p).reshape(B, S, H)
    assert keep.any() and (~keep).any()
    expect = np.where(keep, np.asarray(ref) / (1.0 - p), 0.0)
    np.testing.assert_allclose(out_tr, expect, rtol=1e-5, atol=1e-5)

    print("KERNEL_OK")
</pallas_src>

<mosaic_0001>
module attributes {stable_mosaic.version = 11 : i64} {
  func.func @_bert_embedding_kernel(%arg0: i32, %arg1: memref<1xi32, #tpu.memory_space<smem>>, %arg2: memref<8x16xf32, #tpu.memory_space<vmem>>, %arg3: memref<16x32xf32, #tpu.memory_space<vmem>>, %arg4: memref<8x32xf32, #tpu.memory_space<vmem>>, %arg5: memref<8x32xf32, #tpu.memory_space<vmem>>) attributes {dimension_semantics = [#tpu.dimension_semantics<parallel>], iteration_bounds = array<i64: 2>, scalar_prefetch = 1 : i64, scratch_operands = 0 : i64, tpu.core_type = #tpu.core_type<tc>, window_params = [{transform_indices = @transform_0, window_bounds = array<i64: 8, 16>}, {pipeline_mode = #tpu.pipeline_mode<synchronous>, transform_indices = @transform_1, window_bounds = array<i64: 16, 32>}, {pipeline_mode = #tpu.pipeline_mode<synchronous>, transform_indices = @transform_2, window_bounds = array<i64: 8, 32>}, {transform_indices = @transform_3, window_bounds = array<i64: 8, 32>}]} {
    %c0 = arith.constant 0 : index
    %c0_0 = arith.constant 0 : index
    %0 = vector.load %arg2[%c0, %c0_0] : memref<8x16xf32, #tpu.memory_space<vmem>>, vector<8x16xf32>
    %c0_1 = arith.constant 0 : index
    %c0_2 = arith.constant 0 : index
    %1 = vector.load %arg3[%c0_1, %c0_2] : memref<16x32xf32, #tpu.memory_space<vmem>>, vector<16x32xf32>
    %cst = arith.constant dense<0.000000e+00> : vector<8x32xf32>
    %2 = tpu.matmul %0, %1, %cst {dimension_numbers = #tpu.dot_dimension_numbers<[1], [0], [0], [1], [0, 0, 1, 1], [], []>} : vector<8x16xf32>, vector<16x32xf32>, vector<8x32xf32> -> vector<8x32xf32>
    %c0_3 = arith.constant 0 : index
    %c0_4 = arith.constant 0 : index
    %3 = vector.load %arg4[%c0_3, %c0_4] : memref<8x32xf32, #tpu.memory_space<vmem>>, vector<8x32xf32>
    %4 = arith.addf %2, %3 : vector<8x32xf32>
    %c0_5 = arith.constant 0 : index
    %c0_6 = arith.constant 0 : index
    %5 = vector.load %arg5[%c0_5, %c0_6] : memref<8x32xf32, #tpu.memory_space<vmem>>, vector<8x32xf32>
    tpu.vector_store %arg5[%c0_5, %c0_6], %4 {strides = array<i32>} : memref<8x32xf32, #tpu.memory_space<vmem>>, vector<8x32xf32>,
    return
  }
  func.func @transform_0(%arg0: i32, %arg1: memref<1xi32, #tpu.memory_space<smem>>) -> (i32, i32) {
    %c0_i32 = arith.constant 0 : i32
    %c0_i32_0 = arith.constant 0 : i32
    return %arg0, %c0_i32 : i32, i32
  }
  func.func @transform_1(%arg0: i32, %arg1: memref<1xi32, #tpu.memory_space<smem>>) -> (i32, i32) {
    %c0_i32 = arith.constant 0 : i32
    %c0_i32_0 = arith.constant 0 : i32
    %c0_i32_1 = arith.constant 0 : i32
    return %c0_i32, %c0_i32_0 : i32, i32
  }
  func.func @transform_2(%arg0: i32, %arg1: memref<1xi32, #tpu.memory_space<smem>>) -> (i32, i32) {
    %c0_i32 = arith.constant 0 : i32
    %c0_i32_0 = arith.constant 0 : i32
    %c0_i32_1 = arith.constant 0 : i32
    return %c0_i32, %c0_i32_0 : i32, i32
  }
  func.func @transform_3(%arg0: i32, %arg1: memref<1xi32, #tpu.memory_space<smem>>) -> (i32, i32) {
    %c0_i32 = arith.constant 0 : i32
    %c0_i32_0 = arith.constant 0 : i32
    return %arg0, %c0_i32 : i32, i32
  }
}

</mosaic_0001>

<llo_original>
// kernel: tpu_custom_call.1
$region0: #{tpu_custom_call.1}
  #allocation0 [shape = 'u32[]', space=smem, size = 0x4, offset = 0x4, fixed_abs, tag = 'smem constant byte address 0x4 - core index']
  #allocation1 [shape = 'u32[72,128]{1,0:T(1,128)}', space=vmem, size = 0x9000, scoped, tag = 'internal scratch']
  #allocation2 [shape = 's32[1]{0}', space=sflag, size = 0x4, scoped, tag = 'scoped memory for tpu_custom_call.1']
  #allocation3 [shape = 's32[1]{0:T(128)S(6)}', space=smem, size = 0x200, scoped, tag = 'prefetched SMEM operand 0']
  %s0 = inlined_call_operand.<no memory space> [shape: s32[1], index: 0, kind: input, shape index: {}]
  %s1 = inlined_call_operand.hbm [shape: f32[16,16], index: 1, kind: input, shape index: {}]
  %s2 = inlined_call_operand.hbm [shape: f32[16,32], index: 2, kind: input, shape index: {}]
  %s3 = inlined_call_operand.hbm [shape: f32[8,32], index: 3, kind: input, shape index: {}]
  %s4 = inlined_call_operand.hbm [shape: f32[16,32], index: 4, kind: output, shape index: {}]
  %s5 = sld [smem:[#allocation0]]
  $region57: #{tpu_custom_call.1} parent=0
    _
  %s7 = ssub.s32 1, %s5
  %s8 = scalar_select 0, %s7, %s5
  %9 = sst [smem:[#allocation3]] %s0
  $region1: #{tpu_custom_call.1} parent=0
    #allocation4 [shape = 'u8[8192]{0}', space=vmem, size = 0x2000, scoped, tag = 'input window, operand 1']
    #allocation5 [shape = 's32[2]{0}', space=sflag, size = 0x8, scoped, tag = 'scoped memory for tpu_custom_call.1']
    #allocation6 [shape = 's32[2]{0}', space=sflag, size = 0x8, scoped, tag = 'scoped memory for tpu_custom_call.1']
    #allocation7 [shape = 'u8[8192]{0}', space=vmem, size = 0x2000, scoped, tag = 'input window, operand 2, single buffered']
    #allocation8 [shape = 's32[1]{0}', space=sflag, size = 0x4, scoped, tag = 'scoped memory for tpu_custom_call.1']
    #allocation9 [shape = 'u8[4096]{0}', space=vmem, size = 0x1000, scoped, tag = 'input window, operand 3, single buffered']
    #allocation10 [shape = 'u8[8192]{0}', space=vmem, size = 0x2000, scoped, tag = 'output window, operand 0']
    %10 = vsyncpa [#allocation5], 0
    %s11 = scalar_lea.sflag [#allocation5], 1
    %12 = vsyncpa %s11, 0
    %13 = vsyncpa [#allocation8], 0
    %14 = vsyncpa [#allocation6], 0
    %s15 = scalar_lea.sflag [#allocation6], 1
    %16 = vsyncpa %s15, 0
    loop: start=0, step=1, limit=4
    $region2: #{tpu_custom_call.1} parent=1 // loop_pre_header
      _
    $region3: #{tpu_custom_call.1} parent=1 // loop_header
      %s18 = sphi 0, %s22
      %p19 = scmp.ge.s32.totalorder %s18, 4
      %s28 = sphi 0, %s30
      %s31 = sphi 0, %s28
      %s32 = sphi 0, %s31
      %s48 = sphi 0, %s32
      %s52 = sphi 0, %s52
      %s54 = sphi 0, %s52
      %s55 = sphi 0, %s54
      %s69 = sphi 0, %s55
      %s73 = sphi 0, %s73
      %s75 = sphi 0, %s73
      %s76 = sphi 0, %s75
      %s90 = sphi 0, %s76
      %s96 = sphi 0, %s98
      %s99 = sphi 0, %s96
      %s100 = sphi 0, %s99
      %s116 = sphi 0, %s100
    $region4: #{tpu_custom_call.1} parent=1 // loop_header_branch
      %21 = sbr.rel (%p19) target = $region8
    $region5: #{tpu_custom_call.1} parent=1 // loop_body
      %s23 = ssub.s32 %s18, 1
      %s24 = ssub.s32 %s18, 2
      %s25 = sadd.s32 %s18, 1
      %s26 = ssub.s32 %s18, %s25
      %p27 = scmp.eq.s32.totalorder %s26, 0
      %s29 = sadd.s32 %s28, 1
      %s30 = scalar_select %p27, %s28, %s29
      %p33 = pneg %p27
      %p34 = scmp.eq.s32.totalorder %s18, 1
      %p35 = por %p33, %p34
      %p36 = scmp.ne.s32.totalorder %s28, %s31
      %p37 = scmp.eq.s32.totalorder %s18, 0
      %p38 = por %p36, %p37
      %p39 = scmp.ne.s32.totalorder %s28, %s31
      %p40 = scmp.eq.s32.totalorder %s23, 1
      %p41 = por %p39, %p40
      %p42 = scmp.ne.s32.totalorder %s31, %s32
      %p43 = scmp.eq.s32.totalorder %s23, 0
      %p44 = por %p42, %p43
      %p45 = scmp.ne.s32.totalorder %s31, %s32
      %p46 = scmp.eq.s32.totalorder %s24, 1
      %p47 = por %p45, %p46
      %p49 = scmp.ne.s32.totalorder %s32, %s48
      %p50 = scmp.eq.s32.totalorder %s24, 0
      %p51 = por %p49, %p50
      %s53 = sadd.s32 %s52, 1
      %p56 = scmp.eq.s32.totalorder %s18, 1
      %p57 = scmp.ne.s32.totalorder %s52, %s54
      %p58 = scmp.eq.s32.totalorder %s18, 0
      %p59 = por %p57, %p58
      %p60 = scmp.ne.s32.totalorder %s52, %s54
      %p61 = scmp.eq.s32.totalorder %s23, 1
      %p62 = por %p60, %p61
      %p63 = scmp.ne.s32.totalorder %s54, %s55
      %p64 = scmp.eq.s32.totalorder %s23, 0
      %p65 = por %p63, %p64
      %p66 = scmp.ne.s32.totalorder %s54, %s55
      %p67 = scmp.eq.s32.totalorder %s24, 1
      %p68 = por %p66, %p67
      %p70 = scmp.ne.s32.totalorder %s55, %s69
      %p71 = scmp.eq.s32.totalorder %s24, 0
      %p72 = por %p70, %p71
      %s74 = sadd.s32 %s73, 1
      %p77 = scmp.eq.s32.totalorder %s18, 1
      %p78 = scmp.ne.s32.totalorder %s73, %s75
      %p79 = scmp.eq.s32.totalorder %s18, 0
      %p80 = por %p78, %p79
      %p81 = scmp.ne.s32.totalorder %s73, %s75
      %p82 = scmp.eq.s32.totalorder %s23, 1
      %p83 = por %p81, %p82
      %p84 = scmp.ne.s32.totalorder %s75, %s76
      %p85 = scmp.eq.s32.totalorder %s23, 0
      %p86 = por %p84, %p85
      %p87 = scmp.ne.s32.totalorder %s75, %s76
      %p88 = scmp.eq.s32.totalorder %s24, 1
      %p89 = por %p87, %p88
      %p91 = scmp.ne.s32.totalorder %s76, %s90
      %p92 = scmp.eq.s32.totalorder %s24, 0
      %p93 = por %p91, %p92
      %s94 = ssub.s32 %s18, %s25
      %p95 = scmp.eq.s32.totalorder %s94, 0
      %s97 = sadd.s32 %s96, 1
      %s98 = scalar_select %p95, %s96, %s97
      %p101 = pneg %p95
      %p102 = scmp.eq.s32.totalorder %s18, 1
      %p103 = por %p101, %p102
      %p104 = scmp.ne.s32.totalorder %s96, %s99
      %p105 = scmp.eq.s32.totalorder %s18, 0
      %p106 = por %p104, %p105
      %p107 = scmp.ne.s32.totalorder %s96, %s99
      %p108 = scmp.eq.s32.totalorder %s23, 1
      %p109 = por %p107, %p108
      %p110 = scmp.ne.s32.totalorder %s99, %s100
      %p111 = scmp.eq.s32.totalorder %s23, 0
      %p112 = por %p110, %p111
      %p113 = scmp.ne.s32.totalorder %s99, %s100
      %p114 = scmp.eq.s32.totalorder %s24, 1
      %p115 = por %p113, %p114
      %p117 = scmp.ne.s32.totalorder %s100, %s116
      %p118 = scmp.eq.s32.totalorder %s24, 0
      %p119 = por %p117, %p118
      %p120 = scmp.le.s32.totalorder 1, %s18
      %p121 = scmp.lt.s32.totalorder %s18, 3
      %p122 = pnand %p120, %p121
      %p123 = pneg %p122
      // Predicated region
      $region9: #{tpu_custom_call.1} parent=5 // pred_check
        _
      $region10: #{tpu_custom_call.1} parent=5 // pred_check_branch
        %125 = sbr.rel (%p122) target = $region12
      $region11: #{tpu_custom_call.1} parent=5 // pred_region
        %s126 = ssub.s32 %s18, 1
        // Predicated region
        $region13: #{tpu_custom_call.1} parent=11 // pred_check
          %p127 = pneg %p65
        $region14: #{tpu_custom_call.1} parent=11 // pred_check_branch
          %129 = sbr.rel (%p127) target = $region16
        $region15: #{tpu_custom_call.1} parent=11 // pred_region
          %131 = vsyncadd [#allocation8], 0
          %s132 = sshll.u32 %s2, 4
          %s133 = int_to_ptr.hbm [resolvable:$true] %s132
          %s134 = sshll.u32 [#allocation7], 4
          %s135 = int_to_ptr.vmem [resolvable:$true] %s134
          %140 = dma.hbm_to_vmem [thread:$0]  %s133, 256, %s135, [#allocation8], 128, 128, 8
        $region16: #{tpu_custom_call.1} parent=11 // pred_fallthru
          _
        // Predicated region
        $region17: #{tpu_custom_call.1} parent=11 // pred_check
          %p141 = pneg %p86
        $region18: #{tpu_custom_call.1} parent=11 // pred_check_branch
          %143 = sbr.rel (%p141) target = $region20
        $region19: #{tpu_custom_call.1} parent=11 // pred_region
          %145 = vsyncadd [#allocation8], 0
          %s147 = sshll.u32 %s3, 4
          %s148 = int_to_ptr.hbm [resolvable:$true] %s147
          %s149 = sshll.u32 [#allocation9], 4
          %s150 = int_to_ptr.vmem [resolvable:$true] %s149
          %152 = dma.hbm_to_vmem [thread:$0]  %s148, 128, %s150, [#allocation8]
        $region20: #{tpu_custom_call.1} parent=11 // pred_fallthru
          _
      $region12: #{tpu_custom_call.1} parent=5 // pred_fallthru
        _
      %p153 = scmp.lt.s32.totalorder %s18, 2
      // Predicated region
      $region21: #{tpu_custom_call.1} parent=5 // pred_check
        %p154 = pneg %p153
      $region22: #{tpu_custom_call.1} parent=5 // pred_check_branch
        %156 = sbr.rel (%p154) target = $region24
      $region23: #{tpu_custom_call.1} parent=5 // pred_region
        // Predicated region
        $region25: #{tpu_custom_call.1} parent=23 // pred_check
          %p157 = pneg %p38
        $region26: #{tpu_custom_call.1} parent=23 // pred_check_branch
          %159 = sbr.rel (%p157) target = $region28
        $region27: #{tpu_custom_call.1} parent=23 // pred_region
          %s160 = sand.u32 %s28, 1
          %s161 = scalar_lea.sflag [#allocation5], %s160
          %s162 = sand.u32 %s28, 1
          %s163 = smul.addr %s162, 8
          %s164 = scalar_lea.vmem [#allocation4], %s163
          %166 = vsyncadd %s161, 0
          %s167 = smul.addr %s18, 8
          %s168 = scalar_lea.hbm %s1, %s167
          %s170 = sshll.u32 %s168, 4
          %s171 = int_to_ptr.hbm [resolvable:$true] %s170
          %s172 = sshll.u32 %s164, 4
          %s173 = int_to_ptr.vmem [resolvable:$true] %s172
          %175 = dma.hbm_to_vmem [thread:$0]  %s171, 128, %s173, %s161
        $region28: #{tpu_custom_call.1} parent=23 // pred_fallthru
          _
      $region24: #{tpu_custom_call.1} parent=5 // pred_fallthru
        _
      %p176 = scmp.le.s32.totalorder 1, %s18
      %p177 = scmp.lt.s32.totalorder %s18, 3
      %p178 = pnand %p176, %p177
      %p179 = pneg %p178
      // Predicated region
      $region29: #{tpu_custom_call.1} parent=5 // pred_check
        _
      $region30: #{tpu_custom_call.1} parent=5 // pred_check_branch
        %181 = sbr.rel (%p178) target = $region32
      $region31: #{tpu_custom_call.1} parent=5 // pred_region
        %s182 = ssub.s32 %s18, 1
        %s183 = sand.u32 %s31, 1
        %s184 = scalar_lea.sflag [#allocation5], %s183
        %s185 = sand.u32 %s31, 1
        %s186 = smul.addr %s185, 8
        %s187 = scalar_lea.vmem [#allocation4], %s186
        // Predicated region
        $region33: #{tpu_custom_call.1} parent=31 // pred_check
          %p188 = pneg %p44
        $region34: #{tpu_custom_call.1} parent=31 // pred_check_branch
          %190 = sbr.rel (%p188) target = $region36
        $region35: #{tpu_custom_call.1} parent=31 // pred_region
          %192 = dma.done %s184, 128
        $region36: #{tpu_custom_call.1} parent=31 // pred_fallthru
          _
        // Predicated region
        $region37: #{tpu_custom_call.1} parent=31 // pred_check
          %p193 = pneg %p65
        $region38: #{tpu_custom_call.1} parent=31 // pred_check_branch
          %195 = sbr.rel (%p193) target = $region40
        $region39: #{tpu_custom_call.1} parent=31 // pred_region
          %197 = dma.done [#allocation8], 256
        $region40: #{tpu_custom_call.1} parent=31 // pred_fallthru
          _
        // Predicated region
        $region41: #{tpu_custom_call.1} parent=31 // pred_check
          %p198 = pneg %p86
        $region42: #{tpu_custom_call.1} parent=31 // pred_check_branch
          %200 = sbr.rel (%p198) target = $region44
        $region43: #{tpu_custom_call.1} parent=31 // pred_region
          %202 = dma.done [#allocation8], 128
        $region44: #{tpu_custom_call.1} parent=31 // pred_fallthru
          _
        %s203 = sand.u32 %s31, 1
        %s204 = scalar_lea.sflag [#allocation5], %s203
        %s205 = sand.u32 %s31, 1
        %s206 = smul.addr %s205, 8
        %s207 = scalar_lea.vmem [#allocation4], %s206
        %p208 = pneg %p44
        %p209 = pneg %p41
        %p210 = pneg %p65
        %p211 = pneg %p62
        %p212 = pneg %p86
        %p213 = pneg %p83
        %p214 = pneg %p112
        %p215 = pneg %p109
        %s216 = sand.u32 %s99, 1
        %s217 = scalar_lea.sflag [#allocation6], %s216
        %s218 = sand.u32 %s99, 1
        %s219 = smul.addr %s218, 8
        %s220 = scalar_lea.vmem [#allocation10], %s219
        %v221 = vld [vmem:[%s187] sm:$0xff]
        %v222 = vld [vmem:[#allocation7] sm:$0xff]
        %v223 = vld [vmem:[#allocation7 + $0x8] sm:$0xff]
        %v224 = vld [vmem:[#allocation9] sm:$0xff]
        %vm225 = vcmask 130048
        %v227 = vsel %vm225, %v221, 0
        %229 = vmatpush.msra.mxu0 0.0
        %230 = vmatpush.msra.mxu0 0.0
        %231 = vmatpush.msra.mxu0 0.0
        %232 = vmatpush.msra.mxu0 0.0
        %233 = vmatpush.msra.mxu0 0.0
        %234 = vmatpush.msra.mxu0 0.0
        %235 = vmatpush.msra.mxu0 0.0
        %236 = vmatpush.msra.mxu0 0.0
        %237 = vmatpush.msra.mxu0 0.0
        %238 = vmatpush.msra.mxu0 0.0
        %239 = vmatpush.msra.mxu0 0.0
        %240 = vmatpush.msra.mxu0 0.0
        %241 = vmatpush.msra.mxu0 0.0
        %242 = vmatpush.msra.mxu0 0.0
        %243 = vmatpush.msra.mxu0 %v223
        %244 = vmatpush.msra.mxu0 %v222
        %245 = vmatmul.f32.gmra.mxu0 %v227
        %v246 = vpop.f32.mrf.mxu0
        %v247 = vadd.f32 %v224, %v246
        %248 = vdwg.mxu0
        %vm249 = vcmask 261120
        %250 = vst.msk [vmem:[%s220] sm:$0xff] %vm249, %v247
        %s251 = sand.u32 %s99, 1
        %s252 = scalar_lea.sflag [#allocation6], %s251
        %s253 = sand.u32 %s99, 1
        %s254 = smul.addr %s253, 8
        %s255 = scalar_lea.vmem [#allocation10], %s254
        // Predicated region
        $region45: #{tpu_custom_call.1} parent=31 // pred_check
          %p256 = pneg %p109
        $region46: #{tpu_custom_call.1} parent=31 // pred_check_branch
          %258 = sbr.rel (%p256) target = $region48
        $region47: #{tpu_custom_call.1} parent=31 // pred_region
          %260 = vsyncadd %s252, 0
          %s261 = smul.addr %s23, 8
          %s262 = scalar_lea.hbm %s4, %s261
          %s264 = sshll.u32 %s255, 4
          %s265 = int_to_ptr.vmem [resolvable:$true] %s264
          %s266 = sshll.u32 %s262, 4
          %s267 = int_to_ptr.hbm [resolvable:$true] %s266
          %269 = dma.vmem_to_hbm [thread:$0]  %s265, 128, %s267, %s252
        $region48: #{tpu_custom_call.1} parent=31 // pred_fallthru
          _
      $region32: #{tpu_custom_call.1} parent=5 // pred_fallthru
        _
      %p270 = scmp.le.s32.totalorder 2, %s18
      // Predicated region
      $region49: #{tpu_custom_call.1} parent=5 // pred_check
        %p271 = pneg %p270
      $region50: #{tpu_custom_call.1} parent=5 // pred_check_branch
        %273 = sbr.rel (%p271) target = $region52
      $region51: #{tpu_custom_call.1} parent=5 // pred_region
        %s274 = ssub.s32 %s18, 2
        // Predicated region
        $region53: #{tpu_custom_call.1} parent=51 // pred_check
          %p275 = pneg %p115
        $region54: #{tpu_custom_call.1} parent=51 // pred_check_branch
          %277 = sbr.rel (%p275) target = $region56
        $region55: #{tpu_custom_call.1} parent=51 // pred_region
          %s278 = sand.u32 %s100, 1
          %s279 = scalar_lea.sflag [#allocation6], %s278
          %s280 = sand.u32 %s100, 1
          %s281 = smul.addr %s280, 8
          %s282 = scalar_lea.vmem [#allocation10], %s281
          %284 = dma.done %s279, 128
        $region56: #{tpu_custom_call.1} parent=51 // pred_fallthru
          _
      $region52: #{tpu_custom_call.1} parent=5 // pred_fallthru
        _
    $region6: #{tpu_custom_call.1} parent=1 // loop_footer
      %s22 = sadd.s32 1, %s18
    $region7: #{tpu_custom_call.1} parent=1 // loop_footer_branch
      %17 = sbr.rel target = $region3
    $region8: #{tpu_custom_call.1} parent=1 // loop_exit
      _
    %285 = vsyncpa [#allocation5], 1
    %s286 = scalar_lea.sflag [#allocation5], 1
    %287 = vsyncpa %s286, 1
    %288 = vsyncpa [#allocation8], 1
    %289 = vsyncpa [#allocation6], 1
    %s290 = scalar_lea.sflag [#allocation6], 1
    %291 = vsyncpa %s290, 1

</llo_original>
